<compile_context>
chip_gen: v7x
topology: tpu7x:2x2x1
jax: 0.10.0
libtpu: 0.0.40
codegen_flags: <defaults>
</compile_context>

<pallas_src>
import functools
import math

import jax
import jax.numpy as jnp
from jax import lax
from jax.experimental import pallas as pl
from jax.experimental.pallas import tpu as pltpu


EMBEDDING_DIM = 20
MAX_LENGTH = 14
_NEG_LOG10K = -math.log(10000.0)


def make_positional_encoding(embedding_dim: int, max_length: int) -> jnp.ndarray:
    """Host-side reference PE table, matching the torch buffer exactly."""
    assert embedding_dim % 2 == 0, "embedding_dim must be even (matches torch code)"
    position = jnp.arange(0, max_length, dtype=jnp.float32)[:, None]           # (L, 1)
    div_term = jnp.exp(
        jnp.arange(0, embedding_dim, 2, dtype=jnp.float32)
        * (_NEG_LOG10K / embedding_dim)
    )                                                                            # (E/2,)
    pe = jnp.zeros((max_length, embedding_dim), dtype=jnp.float32)
    pe = pe.at[:, 0::2].set(jnp.sin(position * div_term))
    pe = pe.at[:, 1::2].set(jnp.cos(position * div_term))
    return pe[None, :, :]                                                        # (1, L, E)


def _pe_add_kernel(x_ref, o_ref, *, embedding_dim: int):
    """o = x + PE, with PE generated in-kernel (no HBM pe stream).

    x_ref / o_ref: (B, S, E) blocks resident in VMEM.
    """
    shape = x_ref.shape
    # pos: sequence position (varies along axis 1); dim: embedding index (axis 2).
    pos = lax.broadcasted_iota(jnp.int32, shape, dimension=1).astype(jnp.float32)
    dim = lax.broadcasted_iota(jnp.int32, shape, dimension=2)
    half = (dim >> 1).astype(jnp.float32)                      # i = floor(e / 2)
    inv_freq = jnp.exp(half * jnp.float32(2.0 * _NEG_LOG10K / embedding_dim))
    angle = pos * inv_freq
    pe = jnp.where((dim & 1) == 0, jnp.sin(angle), jnp.cos(angle))
    # Compute in f32, cast explicitly to the output dtype (bf16-safe store).
    o_ref[...] = (x_ref[...].astype(jnp.float32) + pe).astype(o_ref.dtype)


def positional_encoding_forward(
    x: jnp.ndarray, *, max_length: int = MAX_LENGTH
) -> jnp.ndarray:
    """x: (B, S, E). Returns x + pe[:, :S, :] (same semantics as the torch module)."""
    B, S, E = x.shape
    assert S <= max_length, f"sequence length {S} > max_length {max_length}"
    assert E % 2 == 0, "embedding_dim must be even (matches torch code)"

    return pl.pallas_call(
        functools.partial(_pe_add_kernel, embedding_dim=E),
        out_shape=jax.ShapeDtypeStruct((B, S, E), x.dtype),
        # No grid: the whole (B, S, E) tensor is resident in VMEM for the
        # single invocation (640 B at the module's actual shapes).
        in_specs=[pl.BlockSpec(memory_space=pltpu.MemorySpace.VMEM)],
        out_specs=pl.BlockSpec(memory_space=pltpu.MemorySpace.VMEM),
        # Write the result back into x's HBM buffer (callers that still need
        # x afterwards should not donate it; XLA then inserts a copy).
        input_output_aliases={0: 0},
    )(x)


if __name__ == "__main__":
    key = jax.random.PRNGKey(0)
    B, S, E = 2, 8, EMBEDDING_DIM  # seq=8 <= max_length=14

    x = jax.random.normal(key, (B, S, E), dtype=jnp.float32)

    # Reference (plain JAX, same semantics as torch).  Computed and finished
    # *before* the kernel call because x's buffer is donated below.
    ref = x + make_positional_encoding(EMBEDDING_DIM, MAX_LENGTH)[:, :S, :]
    ref = jax.block_until_ready(ref)

    fwd = jax.jit(positional_encoding_forward, donate_argnums=0)
    out = jax.block_until_ready(fwd(x))

    assert out.shape == (B, S, E)
    assert out.dtype == jnp.float32
    # In-kernel sin/cos may differ from XLA's by a few ulps; loose tolerance.
    assert jnp.allclose(out, ref, atol=1e-4, rtol=1e-4), float(
        jnp.max(jnp.abs(out - ref))
    )

    print("KERNEL_OK")
</pallas_src>

<mosaic_0001>
module attributes {stable_mosaic.version = 11 : i64} {
  func.func @_pe_add_kernel(%arg0: memref<2x8x20xf32, #tpu.memory_space<vmem>>, %arg1: memref<2x8x20xf32, #tpu.memory_space<vmem>>) attributes {dimension_semantics = [], scalar_prefetch = 0 : i64, scratch_operands = 0 : i64, tpu.core_type = #tpu.core_type<tc>} {
    %0 = tpu.iota {dimensions = array<i32: 1>} : vector<2x8x20xi32>
    %1 = arith.sitofp %0 : vector<2x8x20xi32> to vector<2x8x20xf32>
    %2 = tpu.iota {dimensions = array<i32: 2>} : vector<2x8x20xi32>
    %c1_i32 = arith.constant 1 : i32
    %3 = vector.broadcast %c1_i32 : i32 to vector<2x8x20xi32>
    %4 = arith.shrsi %2, %3 : vector<2x8x20xi32>
    %5 = arith.sitofp %4 : vector<2x8x20xi32> to vector<2x8x20xf32>
    %cst = arith.constant -0.921034038 : f32
    %6 = vector.broadcast %cst : f32 to vector<2x8x20xf32>
    %7 = arith.mulf %5, %6 : vector<2x8x20xf32>
    %8 = math.exp %7 : vector<2x8x20xf32>
    %9 = arith.mulf %1, %8 : vector<2x8x20xf32>
    %c1_i32_0 = arith.constant 1 : i32
    %10 = vector.broadcast %c1_i32_0 : i32 to vector<2x8x20xi32>
    %11 = arith.andi %2, %10 : vector<2x8x20xi32>
    %c0_i32 = arith.constant 0 : i32
    %12 = vector.broadcast %c0_i32 : i32 to vector<2x8x20xi32>
    %13 = arith.cmpi eq, %11, %12 : vector<2x8x20xi32>
    %14 = math.sin %9 : vector<2x8x20xf32>
    %15 = math.cos %9 : vector<2x8x20xf32>
    %16 = arith.select %13, %14, %15 : vector<2x8x20xi1>, vector<2x8x20xf32>
    %c0 = arith.constant 0 : index
    %c0_1 = arith.constant 0 : index
    %c0_2 = arith.constant 0 : index
    %17 = vector.load %arg0[%c0, %c0_1, %c0_2] : memref<2x8x20xf32, #tpu.memory_space<vmem>>, vector<2x8x20xf32>
    %18 = arith.addf %17, %16 : vector<2x8x20xf32>
    %c0_3 = arith.constant 0 : index
    %c0_4 = arith.constant 0 : index
    %c0_5 = arith.constant 0 : index
    %19 = vector.load %arg1[%c0_3, %c0_4, %c0_5] : memref<2x8x20xf32, #tpu.memory_space<vmem>>, vector<2x8x20xf32>
    tpu.vector_store %arg1[%c0_3, %c0_4, %c0_5], %18 {strides = array<i32>} : memref<2x8x20xf32, #tpu.memory_space<vmem>>, vector<2x8x20xf32>,
    return
  }
}

</mosaic_0001>

<llo_original>
// kernel: positional_encoding_forward.1
$region0: #{positional_encoding_forward.1}
  #allocation0 [shape = 'u32[]', space=smem, size = 0x4, offset = 0x4, fixed_abs, tag = 'smem constant byte address 0x4 - core index']
  #allocation1 [shape = 'u32[144,128]{1,0:T(1,128)}', space=vmem, size = 0x12000, scoped, tag = 'internal scratch']
  %s0 = inlined_call_operand.hbm [shape: f32[2,8,20], index: 0, kind: input, shape index: {}, may-alias: {0,1}]
  %s1 = inlined_call_operand.hbm [shape: f32[2,8,20], index: 1, kind: output, shape index: {}, may-alias: {0,1}]
  %s2 = sld [smem:[#allocation0]]
  $region18: #{positional_encoding_forward.1} parent=0
    _
  %s4 = ssub.s32 1, %s2
  %s5 = scalar_select 0, %s4, %s2
  $region1: #{positional_encoding_forward.1} parent=0
    #allocation2 [shape = 'u8[8192]{0}', space=vmem, size = 0x2000, scoped, tag = 'input window, operand 0, single buffered']
    #allocation3 [shape = 's32[1]{0}', space=sflag, size = 0x4, scoped, tag = 'scoped memory for positional_encoding_forward.1']
    #allocation4 [shape = 's32[1]{0}', space=sflag, size = 0x4, scoped, tag = 'scoped memory for positional_encoding_forward.1']
    #allocation5 [shape = 'u8[8192]{0}', space=vmem, size = 0x2000, scoped, tag = 'output window, operand 0, single buffered']
    %6 = vsyncpa [#allocation3], 0
    %7 = vsyncpa [#allocation4], 0
    // Predicated region
    $region2: #{positional_encoding_forward.1} parent=1 // pred_check
      _
    $region3: #{positional_encoding_forward.1} parent=1 // pred_check_branch
      %9 = sbr.rel (0) target = $region5
    $region4: #{positional_encoding_forward.1} parent=1 // pred_region
      %s11 = ssub.s32 256, 256
      %12 = vsyncadd [#allocation3], %s11
      %s13 = sshll.u32 [#allocation2], 4
      %s14 = int_to_ptr.vmem [resolvable:$true] %s13
      %19 = dma.hbm_to_vmem [thread:$0]  %s0, 256, %s14, [#allocation3], 128, 128, 8
    $region5: #{positional_encoding_forward.1} parent=1 // pred_fallthru
      _
    // Predicated region
    $region6: #{positional_encoding_forward.1} parent=1 // pred_check
      _
    $region7: #{positional_encoding_forward.1} parent=1 // pred_check_branch
      %21 = sbr.rel (0) target = $region9
    $region8: #{positional_encoding_forward.1} parent=1 // pred_region
      %22 = dma.done [#allocation3], 256
    $region9: #{positional_encoding_forward.1} parent=1 // pred_fallthru
      _
    %v23 = vlaneseq
    %v24 = vshrl.u32 %v23, 7
    %v25 = vcvt.s32.f32 %v24
    %v26 = vlaneseq
    %v27 = vand.u32 %v26, 127
    %v28 = vshra.s32 %v27, 1
    %v29 = vcvt.s32.f32 %v28
    %v30 = vmul.f32 %v29, -0.92103404
    %v31 = vmul.f32 %v30, 1.442695
    %v32 = vpow.pop %v31
    %v33 = vmul.f32 %v25, %v32
    %v34 = vand.u32 %v27, 1
    %vm35 = vcmp.eq.s32.totalorder %v34, 0
    %v36 = vand.u32 2147483647, %v33
    %vm37 = vcmp.le.f32.partialorder %v36, 0.7853982
    %vm38 = vcmp.lt.s32.totalorder %v33, 0
    %v39 = vand.u32 %v33, 2139095040
    %v40 = vshrl.u32 %v39, 23
    %v41 = vsub.s32 %v40, 127
    %v42 = vand.u32 2147483647, %v33
    %v43 = vand.u32 %v42, 8388607
    %v44 = vor.u32 %v43, 8388608
    %v45 = vsub.s32 0, %v44
    %v46 = vadd.s32 %v41, 1
    %vm47 = vcmp.gt.s32.totalorder %v46, 0
    %v48 = vsel %vm47, %v46, 0
    %v49 = vshrl.u32 %v48, 5
    %v50 = vand.u32 %v48, 31
    %v51 = vsub.s32 32, %v50
    %v52 = vshrl.u32 683565275, %v51
    %v53 = vshll.u32 683565275, %v50
    %v54 = vshrl.u32 2475754826, %v51
    %v55 = vor.u32 %v53, %v54
    %v56 = vshll.u32 2475754826, %v50
    %v57 = vshrl.u32 2131351028, %v51
    %v58 = vor.u32 %v56, %v57
    %v59 = vshll.u32 2131351028, %v50
    %v60 = vshrl.u32 2102212464, %v51
    %v61 = vor.u32 %v59, %v60
    %v62 = vshll.u32 2102212464, %v50
    %v63 = vshrl.u32 920167782, %v51
    %v64 = vor.u32 %v62, %v63
    %v65 = vshll.u32 920167782, %v50
    %v66 = vshrl.u32 1326507024, %v51
    %v67 = vor.u32 %v65, %v66
    %vm68 = vcmp.lt.s32.totalorder %v49, 1
    %vm69 = vcmp.lt.s32.totalorder %v49, 2
    %vm70 = vcmp.lt.s32.totalorder %v49, 3
    %vm71 = vcmp.lt.s32.totalorder %v49, 4
    %v72 = vsel %vm68, %v52, %v55
    %v73 = vsel %vm71, %v61, 2102212464
    %v74 = vsel %vm70, %v58, %v73
    %v75 = vsel %vm69, %v72, %v74
    %v76 = vsel %vm68, %v55, %v58
    %v77 = vsel %vm71, %v64, 920167782
    %v78 = vsel %vm70, %v61, %v77
    %v79 = vsel %vm69, %v76, %v78
    %v80 = vsel %vm68, %v58, %v61
    %v81 = vsel %vm71, %v67, 1326507024
    %v82 = vsel %vm70, %v64, %v81
    %v83 = vsel %vm69, %v80, %v82
    %v84 = vshll.u32 %v44, 8
    %v85 = vmul.u32.u64.compose %v84, %v83
    %v86 = vextract.low.u32 %v85
    %v87 = vextract.high.u32 %v85
    %v88 = vmul.u32.u64.compose %v84, %v79
    %v89 = vextract.low.u32 %v88
    %v90 = vextract.high.u32 %v88
    %v91 = vmul.u32 %v84, %v75
    %v92 = vadd.s32 %v87, %v89
    %vm93 = vc.u32 %v87, %v89
    %v94 = vadd.s32 %v90, 1
    %v95 = vsel %vm93, %v94, %v90
    %v96 = vadd.s32 %v91, %v95
    %v97 = vadd.s32 %v96, 536870912
    %v98 = vshrl.u32 %v97, 30
    %v99 = vshll.u32 %v98, 30
    %v100 = vsub.s32 %v96, %v99
    %vm101 = vcmp.lt.s32.totalorder %v100, 0
    %v102 = vsub.s32 0, %v100
    %v103 = vsel %vm101, %v102, %v100
    %v104 = vclz %v103
    %v105 = vsub.s32 %v104, 2
    %vm106 = vcmp.gt.s32.totalorder 0, %v105
    %v107 = vsel %vm106, 0, %v105
    %v108 = vsub.s32 32, %v107
    %v109 = vshll.u32 %v100, %v107
    %v110 = vshrl.u32 %v92, %v108
    %v111 = vor.u32 %v109, %v110
    %v112 = vsub.s32 4294967266, %v107
    %v113 = vadd.s32 %v112, 127
    %v114 = vshll.u32 %v113, 23
    %v115 = vor.u32 4788187, %v114
    %v116 = vand.u32 2147483647, %v115
    %v118 = vcvt.s32.f32 %v111
    %v119 = vmul.f32 %v118, %v116
    %v120 = vxor.u32 %v119, 2147483648
    %v121 = vsel %vm38, %v120, %v119
    %v122 = vsub.s32 4, %v98
    %v123 = vsel %vm38, %v122, %v98
    %v124 = vsel %vm37, %v33, %v121
    %v125 = vsel %vm37, 0, %v123
    %v126 = vcosq.f32.pop %v124
    %v127 = vsinq.f32.pop %v124
    %vm128 = vweird.f32 %v33
    %v129 = vadd.s32 %v125, 3
    %v130 = vand.u32 %v129, 3
    %vm131 = vcmp.lt.s32.totalorder %v130, 2
    %vm132 = vcmp.eq.s32.totalorder %v130, 0
    %v133 = vxor.u32 %v127, 2147483648
    %v134 = vsel %vm132, %v126, %v133
    %vm135 = vcmp.eq.s32.totalorder %v130, 2
    %v136 = vxor.u32 %v126, 2147483648
    %v137 = vsel %vm135, %v136, %v127
    %v138 = vsel %vm131, %v134, %v137
    %v139 = vsel %vm128, nan, %v138
    %v140 = vand.u32 2147483647, %v33
    %vm141 = vcmp.le.f32.partialorder %v140, 0.7853982
    %vm142 = vcmp.lt.s32.totalorder %v33, 0
    %v143 = vand.u32 %v33, 2139095040
    %v144 = vshrl.u32 %v143, 23
    %v145 = vsub.s32 %v144, 127
    %v146 = vand.u32 2147483647, %v33
    %v147 = vand.u32 %v146, 8388607
    %v148 = vor.u32 %v147, 8388608
    %v149 = vsub.s32 0, %v148
    %v150 = vadd.s32 %v145, 1
    %vm151 = vcmp.gt.s32.totalorder %v150, 0
    %v152 = vsel %vm151, %v150, 0
    %v153 = vshrl.u32 %v152, 5
    %v154 = vand.u32 %v152, 31
    %v155 = vsub.s32 32, %v154
    %v156 = vshrl.u32 683565275, %v155
    %v157 = vshll.u32 683565275, %v154
    %v158 = vshrl.u32 2475754826, %v155
    %v159 = vor.u32 %v157, %v158
    %v160 = vshll.u32 2475754826, %v154
    %v161 = vshrl.u32 2131351028, %v155
    %v162 = vor.u32 %v160, %v161
    %v163 = vshll.u32 2131351028, %v154
    %v164 = vshrl.u32 2102212464, %v155
    %v165 = vor.u32 %v163, %v164
    %v166 = vshll.u32 2102212464, %v154
    %v167 = vshrl.u32 920167782, %v155
    %v168 = vor.u32 %v166, %v167
    %v169 = vshll.u32 920167782, %v154
    %v170 = vshrl.u32 1326507024, %v155
    %v171 = vor.u32 %v169, %v170
    %vm172 = vcmp.lt.s32.totalorder %v153, 1
    %vm173 = vcmp.lt.s32.totalorder %v153, 2
    %vm174 = vcmp.lt.s32.totalorder %v153, 3
    %vm175 = vcmp.lt.s32.totalorder %v153, 4
    %v176 = vsel %vm172, %v156, %v159
    %v177 = vsel %vm175, %v165, 2102212464
    %v178 = vsel %vm174, %v162, %v177
    %v179 = vsel %vm173, %v176, %v178
    %v180 = vsel %vm172, %v159, %v162
    %v181 = vsel %vm175, %v168, 920167782
    %v182 = vsel %vm174, %v165, %v181
    %v183 = vsel %vm173, %v180, %v182
    %v184 = vsel %vm172, %v162, %v165
    %v185 = vsel %vm175, %v171, 1326507024
    %v186 = vsel %vm174, %v168, %v185
    %v187 = vsel %vm173, %v184, %v186
    %v188 = vshll.u32 %v148, 8
    %v189 = vmul.u32.u64.compose %v188, %v187
    %v190 = vextract.low.u32 %v189
    %v191 = vextract.high.u32 %v189
    %v192 = vmul.u32.u64.compose %v188, %v183
    %v193 = vextract.low.u32 %v192
    %v194 = vextract.high.u32 %v192
    %v195 = vmul.u32 %v188, %v179
    %v196 = vadd.s32 %v191, %v193
    %vm197 = vc.u32 %v191, %v193
    %v198 = vadd.s32 %v194, 1
    %v199 = vsel %vm197, %v198, %v194
    %v200 = vadd.s32 %v195, %v199
    %v201 = vadd.s32 %v200, 536870912
    %v202 = vshrl.u32 %v201, 30
    %v203 = vshll.u32 %v202, 30
    %v204 = vsub.s32 %v200, %v203
    %vm205 = vcmp.lt.s32.totalorder %v204, 0
    %v206 = vsub.s32 0, %v204
    %v207 = vsel %vm205, %v206, %v204
    %v208 = vclz %v207
    %v209 = vsub.s32 %v208, 2
    %vm210 = vcmp.gt.s32.totalorder 0, %v209
    %v211 = vsel %vm210, 0, %v209
    %v212 = vsub.s32 32, %v211
    %v213 = vshll.u32 %v204, %v211
    %v214 = vshrl.u32 %v196, %v212
    %v215 = vor.u32 %v213, %v214
    %v216 = vsub.s32 4294967266, %v211
    %v217 = vadd.s32 %v216, 127
    %v218 = vshll.u32 %v217, 23
    %v219 = vor.u32 4788187, %v218
    %v220 = vand.u32 2147483647, %v219
    %v222 = vcvt.s32.f32 %v215
    %v223 = vmul.f32 %v222, %v220
    %v224 = vxor.u32 %v223, 2147483648
    %v225 = vsel %vm142, %v224, %v223
    %v226 = vsub.s32 4, %v202
    %v227 = vsel %vm142, %v226, %v202
    %v228 = vsel %vm141, %v33, %v225
    %v229 = vsel %vm141, 0, %v227
    %v230 = vcosq.f32.pop %v228
    %v231 = vsinq.f32.pop %v228
    %vm232 = vweird.f32 %v33
    %v233 = vand.u32 %v229, 3
    %vm234 = vcmp.lt.s32.totalorder %v233, 2
    %vm235 = vcmp.eq.s32.totalorder %v233, 0
    %v236 = vxor.u32 %v231, 2147483648
    %v237 = vsel %vm235, %v230, %v236
    %vm238 = vcmp.eq.s32.totalorder %v233, 2
    %v239 = vxor.u32 %v230, 2147483648
    %v240 = vsel %vm238, %v239, %v231
    %v241 = vsel %vm234, %v237, %v240
    %v242 = vsel %vm232, nan, %v241
    %v243 = vsel %vm35, %v139, %v242
    %v244 = vld [vmem:[#allocation2] sm:$0xff]
    %v245 = vld [vmem:[#allocation2 + $0x8] sm:$0xff]
    %v246 = vadd.f32 %v244, %v243
    %v247 = vadd.f32 %v245, %v243
    %vm248 = vcmask 162816
    %249 = vst.msk [vmem:[#allocation5] sm:$0xff] %vm248, %v246
    %250 = vst.msk [vmem:[#allocation5 + $0x8] sm:$0xff] %vm248, %v247
    // Predicated region
    $region10: #{positional_encoding_forward.1} parent=1 // pred_check
      _
    $region11: #{positional_encoding_forward.1} parent=1 // pred_check_branch
      %252 = sbr.rel (0) target = $region13
    $region12: #{positional_encoding_forward.1} parent=1 // pred_region
      %s254 = ssub.s32 256, 256
      %255 = vsyncadd [#allocation4], %s254
      %s256 = sshll.u32 [#allocation5], 4
      %s257 = int_to_ptr.vmem [resolvable:$true] %s256
      %262 = dma.vmem_to_hbm [thread:$0]  %s257, 256, %s1, [#allocation4], 128, 128, 8
    $region13: #{positional_encoding_forward.1} parent=1 // pred_fallthru
      _
    // Predicated region
    $region14: #{positional_encoding_forward.1} parent=1 // pred_check
      _
    $region15: #{positional_encoding_forward.1} parent=1 // pred_check_branch
      %264 = sbr.rel (0) target = $region17
    $region16: #{positional_encoding_forward.1} parent=1 // pred_region
      %265 = dma.done [#allocation4], 256
    $region17: #{positional_encoding_forward.1} parent=1 // pred_fallthru
      _
    %266 = vsyncpa [#allocation3], 1
    %267 = vsyncpa [#allocation4], 1

</llo_original>
